<compile_context>
chip_gen: v5e
topology: v5e:2x2
jax: 0.10.0
libtpu: 0.0.40
codegen_flags: <defaults>
</compile_context>

<pallas_src>
import functools

import jax
import jax.numpy as jnp
from jax.experimental import pallas as pl
from jax.experimental.pallas import tpu as pltpu

EPS = 1e-5
LANE = 128
SUBLANE = 16                      # bf16-safe sublane multiple for M tiles
_VMEM_BUDGET = 40 * 1024 * 1024   # per-call working-set budget (v7x: 64 MiB/TC)


# ---------------------------------------------------------------------------
# small helpers
# ---------------------------------------------------------------------------
def _round_up(x, m):
    return (x + m - 1) // m * m


def _pad_to(a, axis, target):
    if a.shape[axis] == target:
        return a
    pads = [(0, 0)] * a.ndim
    pads[axis] = (0, target - a.shape[axis])
    return jnp.pad(a, pads)


def _vmem_limit(working_set_bytes):
    # Scoped-VMEM budget: modest headroom over the double-buffer-inclusive
    # working-set estimate, clamped at 48 MiB so Mosaic internal scratch /
    # semaphores still fit under v7x's 64 MiB physical VMEM.
    return int(min(max(int(working_set_bytes * 1.25) + (2 << 20), 4 << 20),
                   48 << 20))


# ---------------------------------------------------------------------------
# Kernels
# ---------------------------------------------------------------------------
def _conv_stats_kernel(t_ref, w_ref, y_ref, ps_ref, *, m_true, tile_m):
    """im2col conv: one MXU dot per M-tile + per-tile BN partial stats.

    t_ref : (tile_m, KK*C_pad) packed tap slab (compute dtype)
    w_ref : (KK*C_pad, Cout_pad) packed weights, constant index -> VMEM resident
    y_ref : (tile_m, Cout_pad) conv output (compute dtype; cast AFTER stats)
    ps_ref: (1, 2, Cout_pad) per-tile [sum, sum-of-squares]
    """
    y = jnp.dot(t_ref[...], w_ref[...], preferred_element_type=jnp.float32)
    y_ref[...] = y.astype(y_ref.dtype)
    # Mask padded M rows out of the BN statistics so correctness does not
    # depend on the padded rows of the tap slab being exactly zero.
    rows = (pl.program_id(0) * tile_m
            + jax.lax.broadcasted_iota(jnp.int32, y.shape, 0))
    ym = jnp.where(rows < m_true, y, 0.0)
    ps_ref[0] = jnp.concatenate(
        [jnp.sum(ym, axis=0, keepdims=True),
         jnp.sum(ym * ym, axis=0, keepdims=True)], axis=0)


def _bn_convert_add_relu_kernel(y_ref, xs_ref, wc_ref, bc_ref,
                                scale_ref, shift_ref, o_ref):
    skip = jnp.dot(xs_ref[...], wc_ref[...],
                   preferred_element_type=jnp.float32) + bc_ref[...]
    ybn = y_ref[...].astype(jnp.float32) * scale_ref[...] + shift_ref[...]
    o_ref[...] = jnp.maximum(ybn + skip, 0.0)


def _bn_identity_add_relu_kernel(y_ref, xs_ref, scale_ref, shift_ref, o_ref):
    ybn = y_ref[...].astype(jnp.float32) * scale_ref[...] + shift_ref[...]
    o_ref[...] = jnp.maximum(ybn + xs_ref[...].astype(jnp.float32), 0.0)


# ---------------------------------------------------------------------------
# pallas_call wrappers
# ---------------------------------------------------------------------------
def _run_conv_stats(taps, w, tile_m, m_true, out_dtype):
    """taps: (M_pad, KKC_pad); w: (KKC_pad, Cout_pad)."""
    m_pad, kkc = taps.shape
    cout = w.shape[-1]
    num_m = m_pad // tile_m
    t_isz = jnp.dtype(taps.dtype).itemsize
    w_isz = jnp.dtype(w.dtype).itemsize
    o_isz = jnp.dtype(out_dtype).itemsize
    # Count double-buffering for every operand (constant-index weights too).
    working = (2 * tile_m * kkc * t_isz      # streamed im2col tiles
               + 2 * kkc * cout * w_isz      # resident packed weights
               + 2 * tile_m * cout * o_isz   # y output tiles
               + 2 * 2 * cout * 4)           # partial-stat tiles
    kernel = functools.partial(_conv_stats_kernel, m_true=m_true, tile_m=tile_m)
    return pl.pallas_call(
        kernel,
        grid=(num_m,),
        in_specs=[
            # Streamed (tile_m, KK*C) packed tap slab per M step.
            # TODO(synk): on v5e consider pipeline_mode=pl.Buffered(3) here if
            # profiling still shows exposed DMA after the im2col packing.
            pl.BlockSpec((tile_m, kkc), lambda m: (m, 0)),
            # Packed weights: constant index_map -> DMA'd once, VMEM-resident.
            pl.BlockSpec((kkc, cout), lambda m: (0, 0)),
        ],
        out_specs=[
            pl.BlockSpec((tile_m, cout), lambda m: (m, 0)),
            pl.BlockSpec((1, 2, cout), lambda m: (m, 0, 0)),
        ],
        out_shape=[
            jax.ShapeDtypeStruct((m_pad, cout), out_dtype),
            jax.ShapeDtypeStruct((num_m, 2, cout), jnp.float32),
        ],
        compiler_params=pltpu.CompilerParams(
            dimension_semantics=("parallel",),
            vmem_limit_bytes=_vmem_limit(working)),
    )(taps, w)


def _run_bn_skip_add_relu(y2, xs, wc, bc, scale, shift, tile_m):
    m_pad, c_out = y2.shape
    c_skip = xs.shape[1]
    num_m = m_pad // tile_m
    y_spec = pl.BlockSpec((tile_m, c_out), lambda m: (m, 0))
    xs_spec = pl.BlockSpec((tile_m, c_skip), lambda m: (m, 0))
    vec_spec = pl.BlockSpec((1, c_out), lambda m: (0, 0))
    working = (2 * tile_m * c_out * jnp.dtype(y2.dtype).itemsize
               + 2 * tile_m * c_skip * jnp.dtype(xs.dtype).itemsize
               + 2 * tile_m * c_out * 4        # f32 output tiles
               + 8 * c_out * 4)                # scale/shift/bc vectors
    if wc is None:
        # Identity skip: direct residual add (no matmul against an eye matrix).
        kernel = _bn_identity_add_relu_kernel
        in_specs = [y_spec, xs_spec, vec_spec, vec_spec]
        args = (y2, xs, scale, shift)
    else:
        working += 2 * c_skip * c_out * jnp.dtype(wc.dtype).itemsize
        kernel = _bn_convert_add_relu_kernel
        wc_spec = pl.BlockSpec((c_skip, c_out), lambda m: (0, 0))  # resident
        in_specs = [y_spec, xs_spec, wc_spec, vec_spec, vec_spec, vec_spec]
        args = (y2, xs, wc, bc, scale, shift)
    return pl.pallas_call(
        kernel,
        grid=(num_m,),
        in_specs=in_specs,
        out_specs=pl.BlockSpec((tile_m, c_out), lambda m: (m, 0)),
        out_shape=jax.ShapeDtypeStruct((m_pad, c_out), jnp.float32),
        compiler_params=pltpu.CompilerParams(
            dimension_semantics=("parallel",),
            vmem_limit_bytes=_vmem_limit(working)),
    )(*args)


# ---------------------------------------------------------------------------
# Plain-JAX glue: im2col construction, padding, stats finalization
# ---------------------------------------------------------------------------
def _im2col(x_nhwc, K, stride, Ho, Wo, pad):
    """(N, H, W, C) -> (N*Ho*Wo, K*K*C), taps packed along the lane axis
    in (kh, kw, c) order (matches w.reshape(K*K*C, Cout))."""
    xp = jnp.pad(x_nhwc, ((0, 0), (pad, pad), (pad, pad), (0, 0)))
    cols = []
    for kh in range(K):
        for kw in range(K):
            cols.append(xp[:, kh:kh + stride * Ho:stride,
                           kw:kw + stride * Wo:stride, :])
    t = jnp.concatenate(cols, axis=-1)               # (N, Ho, Wo, K*K*C)
    return t.reshape(-1, K * K * x_nhwc.shape[-1])


def _bn_scale_shift(partial_stats, m_true, gamma, beta, c_pad):
    """Reduce per-tile partial stats -> per-channel affine scale/shift.

    NOTE: single-pass E[y^2]-E[y]^2 in f32 (clamped at 0).  Fine for
    well-scaled activations; switch to a two-pass / Welford scheme if inputs
    have large |mean|/std.
    """
    s = jnp.sum(partial_stats[:, 0, :], axis=0)
    sq = jnp.sum(partial_stats[:, 1, :], axis=0)
    mean = s / m_true
    var = jnp.maximum(sq / m_true - mean * mean, 0.0)
    g = _pad_to(gamma.astype(jnp.float32), 0, c_pad)
    b = _pad_to(beta.astype(jnp.float32), 0, c_pad)
    scale = g * jax.lax.rsqrt(var + EPS)
    shift = b - mean * scale
    return scale[None, :], shift[None, :]


def downsample_forward(x_nchw, params, K, stride, *, tile_m=1024,
                       compute_dtype=jnp.bfloat16):
    """Pallas forward for DownSample.

    tile_m: rows per M-tile (multiple of 16).  1024-2048 is the sweet spot on
      v5e/v6e (128 MiB VMEM); it is auto-shrunk so the working set stays under
      ~40 MiB (v7x, 64 MiB VMEM/TC) and so there are >= 2 M-tiles (megacore).
    compute_dtype: MXU input dtype.  bf16 (default) is MXU-native on v6e/v7x
      and halves DMA bytes; BN math and matmul accumulation stay f32.  Batch
      statistics are then computed from bf16-rounded conv outputs — small
      drift vs a pure-f32 reference is expected (documented, tested < 5e-2).
    """
    x = jnp.transpose(x_nchw, (0, 2, 3, 1)).astype(jnp.float32)  # NCHW->NHWC
    N, H, W, Cin = x.shape
    Cout = params["w1"].shape[-1]
    p = (K - 1) // 2
    Ho = (H + 2 * p - K) // stride + 1
    Wo = (W + 2 * p - K) // stride + 1
    M = N * Ho * Wo
    KK = K * K
    convert = (stride > 1) or (Cin != Cout)

    # Padded dims: contraction dims padded ONCE after packing K*K*C (not per
    # tap), all lane dims to multiples of 128 so stores are lane-dense.
    cout_p = _round_up(Cout, LANE)
    cin_p = _round_up(Cin, LANE)
    kkc1_p = _round_up(KK * Cin, LANE)
    kkc2_p = _round_up(KK * Cout, LANE)
    c_isz = jnp.dtype(compute_dtype).itemsize
    xs_c = cin_p if convert else cout_p
    xs_isz = c_isz if convert else 4

    # --- tile_m selection --------------------------------------------------
    tile_m = max(SUBLANE, (int(tile_m) // SUBLANE) * SUBLANE)
    if M > 2 * SUBLANE:
        # Ensure >= 2 M-tiles so the "parallel" axis can split across the two
        # v7x TensorCores (no-op when M >> tile_m).
        tile_m = min(tile_m, _round_up((M + 1) // 2, SUBLANE))
    else:
        tile_m = min(tile_m, _round_up(M, SUBLANE))

    def _max_working(tm):
        # Per-call working sets, counting double-buffering of every operand.
        conv1 = (2 * tm * kkc1_p * c_isz + 2 * kkc1_p * cout_p * c_isz
                 + 2 * tm * cout_p * c_isz + 4 * cout_p * 4)
        conv2 = (2 * tm * kkc2_p * c_isz + 2 * kkc2_p * cout_p * c_isz
                 + 2 * tm * cout_p * c_isz + 4 * cout_p * 4)
        final = (2 * tm * cout_p * c_isz + 2 * tm * xs_c * xs_isz
                 + 2 * tm * cout_p * 4 + 2 * cin_p * cout_p * c_isz
                 + 8 * cout_p * 4)
        return max(conv1, conv2, final)

    while tile_m > SUBLANE and _max_working(tile_m) > _VMEM_BUDGET:
        tile_m = max(SUBLANE, _round_up(tile_m // 2, SUBLANE))
    m_pad = _round_up(M, tile_m)

    # --- conv1 (KxK, stride s) + BN1 partial stats --------------------------
    t1 = _im2col(x, K, stride, Ho, Wo, p)                    # (M, KK*Cin)
    t1 = _pad_to(_pad_to(t1, 1, kkc1_p), 0, m_pad).astype(compute_dtype)
    w1 = params["w1"].reshape(KK * Cin, Cout)
    w1 = _pad_to(_pad_to(w1, 0, kkc1_p), 1, cout_p).astype(compute_dtype)
    # NOTE: conv biases b1/b2 are intentionally dropped: a per-channel
    # constant is exactly cancelled by the batch-mean subtraction of BN.
    y1, ps1 = _run_conv_stats(t1, w1, tile_m, M, compute_dtype)
    scale1, shift1 = _bn_scale_shift(ps1, M, params["g1"], params["beta1"],
                                     cout_p)

    # --- BN1 + ReLU fused into the conv2 im2col producer --------------------
    # No standalone pallas BN pass: the affine+ReLU is an elementwise producer
    # of the conv2 tap slab, fused by XLA into the same HBM pass as the
    # im2col gather, and applied BEFORE conv2's spatial zero padding (exactly
    # the module semantics: padding pads the activation, not pre-BN values).
    a1 = jnp.maximum(
        y1[:M, :Cout].astype(jnp.float32) * scale1[0, :Cout][None, :]
        + shift1[0, :Cout][None, :], 0.0)
    a1_sp = a1.reshape(N, Ho, Wo, Cout)

    # --- conv2 (KxK, stride 1) + BN2 partial stats ---------------------------
    t2 = _im2col(a1_sp, K, 1, Ho, Wo, p)                     # (M, KK*Cout)
    t2 = _pad_to(_pad_to(t2, 1, kkc2_p), 0, m_pad).astype(compute_dtype)
    w2 = params["w2"].reshape(KK * Cout, Cout)
    w2 = _pad_to(_pad_to(w2, 0, kkc2_p), 1, cout_p).astype(compute_dtype)
    y2, ps2 = _run_conv_stats(t2, w2, tile_m, M, compute_dtype)
    scale2, shift2 = _bn_scale_shift(ps2, M, params["g2"], params["beta2"],
                                     cout_p)

    # --- skip path + BN2 apply + add + ReLU (single fused kernel) ------------
    x_sub = x[:, ::stride, ::stride, :][:, :Ho, :Wo, :].reshape(M, Cin)
    if convert:
        xs = _pad_to(_pad_to(x_sub, 1, cin_p), 0, m_pad).astype(compute_dtype)
        wc = _pad_to(_pad_to(params["wc"], 0, cin_p),
                     1, cout_p).astype(compute_dtype)
        bc = _pad_to(params["bc"].astype(jnp.float32), 0, cout_p)[None, :]
    else:
        # Identity skip: module adds x directly (no 1x1 convert matmul).
        xs = _pad_to(_pad_to(x_sub, 1, cout_p), 0, m_pad)    # keep f32
        wc, bc = None, None
    out = _run_bn_skip_add_relu(y2, xs, wc, bc, scale2, shift2, tile_m)

    out = out[:M, :Cout].reshape(N, Ho, Wo, Cout)
    return jnp.transpose(out, (0, 3, 1, 2))                  # back to NCHW


# ---------------------------------------------------------------------------
# Pure-JAX reference (matches the PyTorch module's forward semantics)
# ---------------------------------------------------------------------------
def reference_forward(x_nchw, params, K, stride):
    x = x_nchw.astype(jnp.float32)
    Cin = x.shape[1]
    Cout = params["w1"].shape[-1]
    p = (K - 1) // 2

    def conv(inp, w_hwio, b, s, pad):
        w_oihw = jnp.transpose(w_hwio, (3, 2, 0, 1))
        y = jax.lax.conv_general_dilated(
            inp, w_oihw, (s, s), [(pad, pad), (pad, pad)],
            dimension_numbers=("NCHW", "OIHW", "NCHW"))
        return y + b[None, :, None, None]

    def bn(y, g, beta):
        mean = jnp.mean(y, axis=(0, 2, 3), keepdims=True)
        var = jnp.mean((y - mean) ** 2, axis=(0, 2, 3), keepdims=True)
        return ((y - mean) * jax.lax.rsqrt(var + EPS)
                * g[None, :, None, None] + beta[None, :, None, None])

    y = conv(x, params["w1"], params["b1"], stride, p)
    y = jnp.maximum(bn(y, params["g1"], params["beta1"]), 0.0)
    y = conv(y, params["w2"], params["b2"], 1, p)
    y = bn(y, params["g2"], params["beta2"])
    if stride > 1 or Cin != Cout:
        wc_hwio = params["wc"][None, None, :, :]
        skip = conv(x, wc_hwio, params["bc"], stride, 0)
    else:
        skip = x                                   # module adds x directly
    return jnp.maximum(y + skip, 0.0)


def _make_params(key, Cin, Cout, K):
    ks = jax.random.split(key, 10)
    return {
        "w1":    0.1 * jax.random.normal(ks[0], (K, K, Cin, Cout), jnp.float32),
        "b1":    0.1 * jax.random.normal(ks[1], (Cout,), jnp.float32),
        "g1":    1.0 + 0.1 * jax.random.normal(ks[2], (Cout,), jnp.float32),
        "beta1": 0.1 * jax.random.normal(ks[3], (Cout,), jnp.float32),
        "w2":    0.1 * jax.random.normal(ks[4], (K, K, Cout, Cout), jnp.float32),
        "b2":    0.1 * jax.random.normal(ks[5], (Cout,), jnp.float32),
        "g2":    1.0 + 0.1 * jax.random.normal(ks[6], (Cout,), jnp.float32),
        "beta2": 0.1 * jax.random.normal(ks[7], (Cout,), jnp.float32),
        "wc":    0.1 * jax.random.normal(ks[8], (Cin, Cout), jnp.float32),
        "bc":    0.1 * jax.random.normal(ks[9], (Cout,), jnp.float32),
    }


# ---------------------------------------------------------------------------
if __name__ == "__main__":
    root = jax.random.PRNGKey(0)
    kpa, kxa, kpb, kxb = jax.random.split(root, 4)

    # Config A: stride-2 downsample with channel change (convert skip path).
    N, Cin, Cout, H, W, K, stride = 2, 4, 8, 16, 16, 3, 2
    params_a = _make_params(kpa, Cin, Cout, K)
    x_a = jax.random.normal(kxa, (N, Cin, H, W), jnp.float32)
    ref_a = reference_forward(x_a, params_a, K, stride)

    # Strict f32-MXU path (default tile_m; auto-clamped for the small M here).
    out_a = jax.block_until_ready(
        downsample_forward(x_a, params_a, K, stride,
                           compute_dtype=jnp.float32))
    assert out_a.shape == (N, Cout, H // stride, W // stride), out_a.shape
    err_a = float(jnp.max(jnp.abs(out_a - ref_a)))
    assert err_a < 2e-3, f"f32 mismatch vs reference: {err_a}"

    # Default bf16-MXU path (v6e/v7x recommendation); documented bf16 drift.
    out_a16 = jax.block_until_ready(
        downsample_forward(x_a, params_a, K, stride))
    err_a16 = float(jnp.max(jnp.abs(out_a16 - ref_a)))
    assert err_a16 < 5e-2, f"bf16 mismatch vs reference: {err_a16}"

    # Config B: stride-1, Cin == Cout -> identity skip path.
    N, Cin, Cout, H, W, K, stride = 2, 8, 8, 16, 16, 3, 1
    params_b = _make_params(kpb, Cin, Cout, K)
    x_b = jax.random.normal(kxb, (N, Cin, H, W), jnp.float32)
    out_b = jax.block_until_ready(
        downsample_forward(x_b, params_b, K, stride,
                           compute_dtype=jnp.float32))
    ref_b = reference_forward(x_b, params_b, K, stride)
    err_b = float(jnp.max(jnp.abs(out_b - ref_b)))
    assert err_b < 2e-3, f"identity-skip mismatch vs reference: {err_b}"

    print("KERNEL_OK")
</pallas_src>

<mosaic_0001>
module attributes {stable_mosaic.version = 11 : i64} {
  func.func @_conv_stats_kernel(%arg0: i32, %arg1: memref<64x128xf32, #tpu.memory_space<vmem>>, %arg2: memref<128x128xf32, #tpu.memory_space<vmem>>, %arg3: memref<64x128xf32, #tpu.memory_space<vmem>>, %arg4: memref<1x2x128xf32, #tpu.memory_space<vmem>>) attributes {dimension_semantics = [#tpu.dimension_semantics<parallel>], iteration_bounds = array<i64: 2>, scalar_prefetch = 0 : i64, scratch_operands = 0 : i64, tpu.core_type = #tpu.core_type<tc>, window_params = [{transform_indices = @transform_0, window_bounds = array<i64: 64, 128>}, {pipeline_mode = #tpu.pipeline_mode<synchronous>, transform_indices = @transform_1, window_bounds = array<i64: 128, 128>}, {transform_indices = @transform_2, window_bounds = array<i64: 64, 128>}, {transform_indices = @transform_3, window_bounds = array<i64: 1, 2, 128>}]} {
    %c0 = arith.constant 0 : index
    %c0_0 = arith.constant 0 : index
    %0 = vector.load %arg1[%c0, %c0_0] : memref<64x128xf32, #tpu.memory_space<vmem>>, vector<64x128xf32>
    %c0_1 = arith.constant 0 : index
    %c0_2 = arith.constant 0 : index
    %1 = vector.load %arg2[%c0_1, %c0_2] : memref<128x128xf32, #tpu.memory_space<vmem>>, vector<128x128xf32>
    %cst = arith.constant dense<0.000000e+00> : vector<64x128xf32>
    %2 = tpu.matmul %0, %1, %cst {dimension_numbers = #tpu.dot_dimension_numbers<[1], [0], [0], [1], [0, 0, 1, 1], [], []>} : vector<64x128xf32>, vector<128x128xf32>, vector<64x128xf32> -> vector<64x128xf32>
    %c0_3 = arith.constant 0 : index
    %c0_4 = arith.constant 0 : index
    %3 = vector.load %arg3[%c0_3, %c0_4] : memref<64x128xf32, #tpu.memory_space<vmem>>, vector<64x128xf32>
    tpu.vector_store %arg3[%c0_3, %c0_4], %2 {strides = array<i32>} : memref<64x128xf32, #tpu.memory_space<vmem>>, vector<64x128xf32>,
    %c64_i32 = arith.constant 64 : i32
    %4 = arith.muli %arg0, %c64_i32 : i32
    %5 = tpu.iota {dimensions = array<i32: 0>} : vector<64x128xi32>
    %6 = vector.broadcast %4 : i32 to vector<64x128xi32>
    %7 = arith.addi %6, %5 : vector<64x128xi32>
    %c128_i32 = arith.constant 128 : i32
    %8 = vector.broadcast %c128_i32 : i32 to vector<64x128xi32>
    %9 = arith.cmpi slt, %7, %8 : vector<64x128xi32>
    %cst_5 = arith.constant 0.000000e+00 : f32
    %10 = vector.broadcast %cst_5 : f32 to vector<64x128xf32>
    %11 = arith.select %9, %2, %10 : vector<64x128xi1>, vector<64x128xf32>
    %cst_6 = arith.constant dense<0.000000e+00> : vector<128xf32>
    %12 = vector.multi_reduction <add>, %11, %cst_6 [0] : vector<64x128xf32> to vector<128xf32>
    %13 = vector.shape_cast %12 : vector<128xf32> to vector<1x128xf32>
    %14 = arith.mulf %11, %11 : vector<64x128xf32>
    %cst_7 = arith.constant dense<0.000000e+00> : vector<128xf32>
    %15 = vector.multi_reduction <add>, %14, %cst_7 [0] : vector<64x128xf32> to vector<128xf32>
    %16 = vector.shape_cast %15 : vector<128xf32> to vector<1x128xf32>
    %17 = tpu.concatenate %13, %16 in 0 : vector<1x128xf32>, vector<1x128xf32> -> vector<2x128xf32>
    %c0_8 = arith.constant 0 : index
    %c0_9 = arith.constant 0 : index
    %c0_10 = arith.constant 0 : index
    %18 = vector.load %arg4[%c0_8, %c0_9, %c0_10] : memref<1x2x128xf32, #tpu.memory_space<vmem>>, vector<1x2x128xf32>
    %19 = vector.shape_cast %18 : vector<1x2x128xf32> to vector<2x128xf32>
    %20 = vector.shape_cast %17 : vector<2x128xf32> to vector<1x2x128xf32>
    tpu.vector_store %arg4[%c0_8, %c0_9, %c0_10], %20 {strides = array<i32>} : memref<1x2x128xf32, #tpu.memory_space<vmem>>, vector<1x2x128xf32>,
    return
  }
  func.func @transform_0(%arg0: i32) -> (i32, i32) {
    %c0_i32 = arith.constant 0 : i32
    %c0_i32_0 = arith.constant 0 : i32
    return %arg0, %c0_i32 : i32, i32
  }
  func.func @transform_1(%arg0: i32) -> (i32, i32) {
    %c0_i32 = arith.constant 0 : i32
    %c0_i32_0 = arith.constant 0 : i32
    %c0_i32_1 = arith.constant 0 : i32
    return %c0_i32, %c0_i32_0 : i32, i32
  }
  func.func @transform_2(%arg0: i32) -> (i32, i32) {
    %c0_i32 = arith.constant 0 : i32
    %c0_i32_0 = arith.constant 0 : i32
    return %arg0, %c0_i32 : i32, i32
  }
  func.func @transform_3(%arg0: i32) -> (i32, i32, i32) {
    %c0_i32 = arith.constant 0 : i32
    %c0_i32_0 = arith.constant 0 : i32
    %c0_i32_1 = arith.constant 0 : i32
    return %arg0, %c0_i32, %c0_i32_0 : i32, i32, i32
  }
}

</mosaic_0001>

<llo_original>
// kernel: tpu_custom_call.1
$region0: #{tpu_custom_call.1}
  #allocation0 [shape = 'u32[]', space=smem, size = 0x4, offset = 0x4, fixed_abs, tag = 'smem constant byte address 0x4 - core index']
  #allocation1 [shape = 'u32[72,128]{1,0:T(1,128)}', space=vmem, size = 0x9000, scoped, tag = 'internal scratch']
  %s0 = inlined_call_operand.hbm [shape: f32[128,128], index: 0, kind: input, shape index: {}]
  %s1 = inlined_call_operand.hbm [shape: f32[128,128], index: 1, kind: input, shape index: {}]
  %s2 = inlined_call_operand.hbm [shape: f32[128,128], index: 2, kind: output, shape index: {0}]
  %s3 = inlined_call_operand.hbm [shape: f32[2,2,128], index: 3, kind: output, shape index: {1}]
  %4 = xla_tuple %s2, %s3
  %s5 = sld [smem:[#allocation0]]
  $region57: #{tpu_custom_call.1} parent=0
    _
  %s7 = ssub.s32 1, %s5
  %s8 = scalar_select 0, %s7, %s5
  $region1: #{tpu_custom_call.1} parent=0
    #allocation2 [shape = 'u8[65536]{0}', space=vmem, size = 0x10000, scoped, tag = 'input window, operand 0']
    #allocation3 [shape = 's32[2]{0}', space=sflag, size = 0x8, scoped, tag = 'scoped memory for tpu_custom_call.1']
    #allocation4 [shape = 's32[2]{0}', space=sflag, size = 0x8, scoped, tag = 'scoped memory for tpu_custom_call.1']
    #allocation5 [shape = 'u8[65536]{0}', space=vmem, size = 0x10000, scoped, tag = 'input window, operand 1, single buffered']
    #allocation6 [shape = 's32[1]{0}', space=sflag, size = 0x4, scoped, tag = 'scoped memory for tpu_custom_call.1']
    #allocation7 [shape = 'u8[65536]{0}', space=vmem, size = 0x10000, scoped, tag = 'output window, operand 0']
    #allocation8 [shape = 'u8[2048]{0}', space=vmem, size = 0x800, scoped, tag = 'output window, operand 1']
    #allocation9 [shape = 's32[2]{0}', space=sflag, size = 0x8, scoped, tag = 'scoped memory for tpu_custom_call.1']
    %9 = vsyncpa [#allocation3], 0
    %s10 = scalar_lea.sflag [#allocation3], 1
    %11 = vsyncpa %s10, 0
    %12 = vsyncpa [#allocation6], 0
    %13 = vsyncpa [#allocation4], 0
    %s14 = scalar_lea.sflag [#allocation4], 1
    %15 = vsyncpa %s14, 0
    %16 = vsyncpa [#allocation9], 0
    %s17 = scalar_lea.sflag [#allocation9], 1
    %18 = vsyncpa %s17, 0
    loop: start=0, step=1, limit=4
    $region2: #{tpu_custom_call.1} parent=1 // loop_pre_header
      _
    $region3: #{tpu_custom_call.1} parent=1 // loop_header
      %s20 = sphi 0, %s24
      %p21 = scmp.ge.s32.totalorder %s20, 4
      %s30 = sphi 0, %s32
      %s33 = sphi 0, %s30
      %s34 = sphi 0, %s33
      %s50 = sphi 0, %s34
      %s54 = sphi 0, %s54
      %s56 = sphi 0, %s54
      %s57 = sphi 0, %s56
      %s71 = sphi 0, %s57
      %s77 = sphi 0, %s79
      %s80 = sphi 0, %s77
      %s81 = sphi 0, %s80
      %s97 = sphi 0, %s81
      %s103 = sphi 0, %s105
      %s106 = sphi 0, %s103
      %s107 = sphi 0, %s106
      %s123 = sphi 0, %s107
    $region4: #{tpu_custom_call.1} parent=1 // loop_header_branch
      %23 = sbr.rel (%p21) target = $region8
    $region5: #{tpu_custom_call.1} parent=1 // loop_body
      %s25 = ssub.s32 %s20, 1
      %s26 = ssub.s32 %s20, 2
      %s27 = sadd.s32 %s20, 1
      %s28 = ssub.s32 %s20, %s27
      %p29 = scmp.eq.s32.totalorder %s28, 0
      %s31 = sadd.s32 %s30, 1
      %s32 = scalar_select %p29, %s30, %s31
      %p35 = pneg %p29
      %p36 = scmp.eq.s32.totalorder %s20, 1
      %p37 = por %p35, %p36
      %p38 = scmp.ne.s32.totalorder %s30, %s33
      %p39 = scmp.eq.s32.totalorder %s20, 0
      %p40 = por %p38, %p39
      %p41 = scmp.ne.s32.totalorder %s30, %s33
      %p42 = scmp.eq.s32.totalorder %s25, 1
      %p43 = por %p41, %p42
      %p44 = scmp.ne.s32.totalorder %s33, %s34
      %p45 = scmp.eq.s32.totalorder %s25, 0
      %p46 = por %p44, %p45
      %p47 = scmp.ne.s32.totalorder %s33, %s34
      %p48 = scmp.eq.s32.totalorder %s26, 1
      %p49 = por %p47, %p48
      %p51 = scmp.ne.s32.totalorder %s34, %s50
      %p52 = scmp.eq.s32.totalorder %s26, 0
      %p53 = por %p51, %p52
      %s55 = sadd.s32 %s54, 1
      %p58 = scmp.eq.s32.totalorder %s20, 1
      %p59 = scmp.ne.s32.totalorder %s54, %s56
      %p60 = scmp.eq.s32.totalorder %s20, 0
      %p61 = por %p59, %p60
      %p62 = scmp.ne.s32.totalorder %s54, %s56
      %p63 = scmp.eq.s32.totalorder %s25, 1
      %p64 = por %p62, %p63
      %p65 = scmp.ne.s32.totalorder %s56, %s57
      %p66 = scmp.eq.s32.totalorder %s25, 0
      %p67 = por %p65, %p66
      %p68 = scmp.ne.s32.totalorder %s56, %s57
      %p69 = scmp.eq.s32.totalorder %s26, 1
      %p70 = por %p68, %p69
      %p72 = scmp.ne.s32.totalorder %s57, %s71
      %p73 = scmp.eq.s32.totalorder %s26, 0
      %p74 = por %p72, %p73
      %s75 = ssub.s32 %s20, %s27
      %p76 = scmp.eq.s32.totalorder %s75, 0
      %s78 = sadd.s32 %s77, 1
      %s79 = scalar_select %p76, %s77, %s78
      %p82 = pneg %p76
      %p83 = scmp.eq.s32.totalorder %s20, 1
      %p84 = por %p82, %p83
      %p85 = scmp.ne.s32.totalorder %s77, %s80
      %p86 = scmp.eq.s32.totalorder %s20, 0
      %p87 = por %p85, %p86
      %p88 = scmp.ne.s32.totalorder %s77, %s80
      %p89 = scmp.eq.s32.totalorder %s25, 1
      %p90 = por %p88, %p89
      %p91 = scmp.ne.s32.totalorder %s80, %s81
      %p92 = scmp.eq.s32.totalorder %s25, 0
      %p93 = por %p91, %p92
      %p94 = scmp.ne.s32.totalorder %s80, %s81
      %p95 = scmp.eq.s32.totalorder %s26, 1
      %p96 = por %p94, %p95
      %p98 = scmp.ne.s32.totalorder %s81, %s97
      %p99 = scmp.eq.s32.totalorder %s26, 0
      %p100 = por %p98, %p99
      %s101 = ssub.s32 %s20, %s27
      %p102 = scmp.eq.s32.totalorder %s101, 0
      %s104 = sadd.s32 %s103, 1
      %s105 = scalar_select %p102, %s103, %s104
      %p108 = pneg %p102
      %p109 = scmp.eq.s32.totalorder %s20, 1
      %p110 = por %p108, %p109
      %p111 = scmp.ne.s32.totalorder %s103, %s106
      %p112 = scmp.eq.s32.totalorder %s20, 0
      %p113 = por %p111, %p112
      %p114 = scmp.ne.s32.totalorder %s103, %s106
      %p115 = scmp.eq.s32.totalorder %s25, 1
      %p116 = por %p114, %p115
      %p117 = scmp.ne.s32.totalorder %s106, %s107
      %p118 = scmp.eq.s32.totalorder %s25, 0
      %p119 = por %p117, %p118
      %p120 = scmp.ne.s32.totalorder %s106, %s107
      %p121 = scmp.eq.s32.totalorder %s26, 1
      %p122 = por %p120, %p121
      %p124 = scmp.ne.s32.totalorder %s107, %s123
      %p125 = scmp.eq.s32.totalorder %s26, 0
      %p126 = por %p124, %p125
      %p127 = scmp.le.s32.totalorder 1, %s20
      %p128 = scmp.lt.s32.totalorder %s20, 3
      %p129 = pnand %p127, %p128
      %p130 = pneg %p129
      // Predicated region
      $region9: #{tpu_custom_call.1} parent=5 // pred_check
        _
      $region10: #{tpu_custom_call.1} parent=5 // pred_check_branch
        %132 = sbr.rel (%p129) target = $region12
      $region11: #{tpu_custom_call.1} parent=5 // pred_region
        %s133 = ssub.s32 %s20, 1
        // Predicated region
        $region13: #{tpu_custom_call.1} parent=11 // pred_check
          %p134 = pneg %p67
        $region14: #{tpu_custom_call.1} parent=11 // pred_check_branch
          %136 = sbr.rel (%p134) target = $region16
        $region15: #{tpu_custom_call.1} parent=11 // pred_region
          %138 = vsyncadd [#allocation6], 0
          %s139 = sshll.u32 %s1, 4
          %s140 = int_to_ptr.hbm [resolvable:$true] %s139
          %s141 = sshll.u32 [#allocation5], 4
          %s142 = int_to_ptr.vmem [resolvable:$true] %s141
          %147 = dma.hbm_to_vmem [thread:$0]  %s140, 2048, %s142, [#allocation6], 128, 128, 8
        $region16: #{tpu_custom_call.1} parent=11 // pred_fallthru
          _
      $region12: #{tpu_custom_call.1} parent=5 // pred_fallthru
        _
      %p148 = scmp.lt.s32.totalorder %s20, 2
      // Predicated region
      $region17: #{tpu_custom_call.1} parent=5 // pred_check
        %p149 = pneg %p148
      $region18: #{tpu_custom_call.1} parent=5 // pred_check_branch
        %151 = sbr.rel (%p149) target = $region20
      $region19: #{tpu_custom_call.1} parent=5 // pred_region
        // Predicated region
        $region21: #{tpu_custom_call.1} parent=19 // pred_check
          %p152 = pneg %p40
        $region22: #{tpu_custom_call.1} parent=19 // pred_check_branch
          %154 = sbr.rel (%p152) target = $region24
        $region23: #{tpu_custom_call.1} parent=19 // pred_region
          %s155 = sand.u32 %s30, 1
          %s156 = scalar_lea.sflag [#allocation3], %s155
          %s157 = sand.u32 %s30, 1
          %s158 = smul.addr %s157, 64
          %s159 = scalar_lea.vmem [#allocation2], %s158
          %s160 = smul.u32 8, %s20
          %162 = vsyncadd %s156, 0
          %s163 = smul.addr %s160, 8
          %s164 = scalar_lea.hbm %s0, %s163
          %s165 = sshll.u32 %s164, 4
          %s166 = int_to_ptr.hbm [resolvable:$true] %s165
          %s167 = sshll.u32 %s159, 4
          %s168 = int_to_ptr.vmem [resolvable:$true] %s167
          %173 = dma.hbm_to_vmem [thread:$0]  %s166, 1024, %s168, %s156, 128, 128, 8
        $region24: #{tpu_custom_call.1} parent=19 // pred_fallthru
          _
      $region20: #{tpu_custom_call.1} parent=5 // pred_fallthru
        _
      %p174 = scmp.le.s32.totalorder 1, %s20
      %p175 = scmp.lt.s32.totalorder %s20, 3
      %p176 = pnand %p174, %p175
      %p177 = pneg %p176
      // Predicated region
      $region25: #{tpu_custom_call.1} parent=5 // pred_check
        _
      $region26: #{tpu_custom_call.1} parent=5 // pred_check_branch
        %179 = sbr.rel (%p176) target = $region28
      $region27: #{tpu_custom_call.1} parent=5 // pred_region
        %s180 = ssub.s32 %s20, 1
        %s181 = sand.u32 %s33, 1
        %s182 = scalar_lea.sflag [#allocation3], %s181
        %s183 = sand.u32 %s33, 1
        %s184 = smul.addr %s183, 64
        %s185 = scalar_lea.vmem [#allocation2], %s184
        // Predicated region
        $region29: #{tpu_custom_call.1} parent=27 // pred_check
          %p186 = pneg %p46
        $region30: #{tpu_custom_call.1} parent=27 // pred_check_branch
          %188 = sbr.rel (%p186) target = $region32
        $region31: #{tpu_custom_call.1} parent=27 // pred_region
          %190 = dma.done %s182, 1024
        $region32: #{tpu_custom_call.1} parent=27 // pred_fallthru
          _
        // Predicated region
        $region33: #{tpu_custom_call.1} parent=27 // pred_check
          %p191 = pneg %p67
        $region34: #{tpu_custom_call.1} parent=27 // pred_check_branch
          %193 = sbr.rel (%p191) target = $region36
        $region35: #{tpu_custom_call.1} parent=27 // pred_region
          %195 = dma.done [#allocation6], 2048
        $region36: #{tpu_custom_call.1} parent=27 // pred_fallthru
          _
        %s196 = sand.u32 %s33, 1
        %s197 = scalar_lea.sflag [#allocation3], %s196
        %s198 = sand.u32 %s33, 1
        %s199 = smul.addr %s198, 64
        %s200 = scalar_lea.vmem [#allocation2], %s199
        %p201 = pneg %p46
        %p202 = pneg %p43
        %p203 = pneg %p67
        %p204 = pneg %p64
        %p205 = pneg %p93
        %p206 = pneg %p90
        %s207 = sand.u32 %s80, 1
        %s208 = scalar_lea.sflag [#allocation4], %s207
        %s209 = sand.u32 %s80, 1
        %s210 = smul.addr %s209, 64
        %s211 = scalar_lea.vmem [#allocation7], %s210
        %p212 = pneg %p119
        %p213 = pneg %p116
        %s214 = sand.u32 %s106, 1
        %s215 = scalar_lea.sflag [#allocation9], %s214
        %s216 = sand.u32 %s106, 1
        %s217 = smul.addr %s216, 2
        %s218 = scalar_lea.vmem [#allocation8], %s217
        %s219 = smul.u32 8, %s25
        %s220 = smul.u32 8, %s25
        %v221 = vld [vmem:[%s185] sm:$0xff]
        %v222 = vld [vmem:[%s185 + $0x8] sm:$0xff]
        %v223 = vld [vmem:[%s185 + $0x10] sm:$0xff]
        %v224 = vld [vmem:[%s185 + $0x18] sm:$0xff]
        %v225 = vld [vmem:[%s185 + $0x20] sm:$0xff]
        %v226 = vld [vmem:[%s185 + $0x28] sm:$0xff]
        %v227 = vld [vmem:[%s185 + $0x30] sm:$0xff]
        %v228 = vld [vmem:[%s185 + $0x38] sm:$0xff]
        %v229 = vld [vmem:[#allocation5] sm:$0xff]
        %v230 = vld [vmem:[#allocation5 + $0x8] sm:$0xff]
        %v231 = vld [vmem:[#allocation5 + $0x10] sm:$0xff]
        %v232 = vld [vmem:[#allocation5 + $0x18] sm:$0xff]
        %v233 = vld [vmem:[#allocation5 + $0x20] sm:$0xff]
        %v234 = vld [vmem:[#allocation5 + $0x28] sm:$0xff]
        %v235 = vld [vmem:[#allocation5 + $0x30] sm:$0xff]
        %v236 = vld [vmem:[#allocation5 + $0x38] sm:$0xff]
        %v237 = vld [vmem:[#allocation5 + $0x40] sm:$0xff]
        %v238 = vld [vmem:[#allocation5 + $0x48] sm:$0xff]
        %v239 = vld [vmem:[#allocation5 + $0x50] sm:$0xff]
        %v240 = vld [vmem:[#allocation5 + $0x58] sm:$0xff]
        %v241 = vld [vmem:[#allocation5 + $0x60] sm:$0xff]
        %v242 = vld [vmem:[#allocation5 + $0x68] sm:$0xff]
        %v243 = vld [vmem:[#allocation5 + $0x70] sm:$0xff]
        %v244 = vld [vmem:[#allocation5 + $0x78] sm:$0xff]
        %245 = vmatpush.msra.mxu0 %v244
        %246 = vmatpush.msra.mxu0 %v243
        %247 = vmatpush.msra.mxu0 %v242
        %248 = vmatpush.msra.mxu0 %v241
        %249 = vmatpush.msra.mxu0 %v240
        %250 = vmatpush.msra.mxu0 %v239
        %251 = vmatpush.msra.mxu0 %v238
        %252 = vmatpush.msra.mxu0 %v237
        %253 = vmatpush.msra.mxu0 %v236
        %254 = vmatpush.msra.mxu0 %v235
        %255 = vmatpush.msra.mxu0 %v234
        %256 = vmatpush.msra.mxu0 %v233
        %257 = vmatpush.msra.mxu0 %v232
        %258 = vmatpush.msra.mxu0 %v231
        %259 = vmatpush.msra.mxu0 %v230
        %260 = vmatpush.msra.mxu0 %v229
        %261 = vmatmul.f32.gmra.mxu0 %v221
        %v262 = vpop.f32.mrf.mxu0
        %v263 = vadd.f32 0.0, %v262
        %264 = vmatmul.f32.gmra.mxu0 %v222
        %v265 = vpop.f32.mrf.mxu0
        %v266 = vadd.f32 0.0, %v265
        %267 = vmatmul.f32.gmra.mxu0 %v223
        %v268 = vpop.f32.mrf.mxu0
        %v269 = vadd.f32 0.0, %v268
        %270 = vmatmul.f32.gmra.mxu0 %v224
        %v271 = vpop.f32.mrf.mxu0
        %v272 = vadd.f32 0.0, %v271
        %273 = vmatmul.f32.gmra.mxu0 %v225
        %v274 = vpop.f32.mrf.mxu0
        %v275 = vadd.f32 0.0, %v274
        %276 = vmatmul.f32.gmra.mxu0 %v226
        %v277 = vpop.f32.mrf.mxu0
        %v278 = vadd.f32 0.0, %v277
        %279 = vmatmul.f32.gmra.mxu0 %v227
        %v280 = vpop.f32.mrf.mxu0
        %v281 = vadd.f32 0.0, %v280
        %282 = vmatmul.f32.gmra.mxu0 %v228
        %v283 = vpop.f32.mrf.mxu0
        %v284 = vadd.f32 0.0, %v283
        %285 = vdwg.mxu0
        %286 = vst [vmem:[%s211] sm:$0xff] %v263
        %287 = vst [vmem:[%s211 + $0x8] sm:$0xff] %v266
        %288 = vst [vmem:[%s211 + $0x10] sm:$0xff] %v269
        %289 = vst [vmem:[%s211 + $0x18] sm:$0xff] %v272
        %290 = vst [vmem:[%s211 + $0x20] sm:$0xff] %v275
        %291 = vst [vmem:[%s211 + $0x28] sm:$0xff] %v278
        %292 = vst [vmem:[%s211 + $0x30] sm:$0xff] %v281
        %293 = vst [vmem:[%s211 + $0x38] sm:$0xff] %v284
        %s294 = smul.u32 %s25, 64
        %v295 = vlaneseq
        %v296 = vshrl.u32 %v295, 7
        %v297 = vadd.s32 %v296, 8
        %v298 = vadd.s32 %v296, 16
        %v299 = vadd.s32 %v296, 24
        %v300 = vadd.s32 %v296, 32
        %v301 = vadd.s32 %v296, 40
        %v302 = vadd.s32 %v296, 48
        %v303 = vadd.s32 %v296, 56
        %v304 = vstv %s294
        %v305 = vadd.s32 %v304, %v296
        %v306 = vadd.s32 %v304, %v297
        %v307 = vadd.s32 %v304, %v298
        %v308 = vadd.s32 %v304, %v299
        %v309 = vadd.s32 %v304, %v300
        %v310 = vadd.s32 %v304, %v301
        %v311 = vadd.s32 %v304, %v302
        %v312 = vadd.s32 %v304, %v303
        %vm313 = vcmp.lt.s32.totalorder %v305, 128
        %vm314 = vcmp.lt.s32.totalorder %v306, 128
        %vm315 = vcmp.lt.s32.totalorder %v307, 128
        %vm316 = vcmp.lt.s32.totalorder %v308, 128
        %vm317 = vcmp.lt.s32.totalorder %v309, 128
        %vm318 = vcmp.lt.s32.totalorder %v310, 128
        %vm319 = vcmp.lt.s32.totalorder %v311, 128
        %vm320 = vcmp.lt.s32.totalorder %v312, 128
        %v321 = vsel %vm313, %v263, 0.0
        %v322 = vsel %vm314, %v266, 0.0
        %v323 = vsel %vm315, %v269, 0.0
        %v324 = vsel %vm316, %v272, 0.0
        %v325 = vsel %vm317, %v275, 0.0
        %v326 = vsel %vm318, %v278, 0.0
        %v327 = vsel %vm319, %v281, 0.0
        %v328 = vsel %vm320, %v284, 0.0
        %v329 = vadd.f32 %v321, %v322
        %v330 = vadd.f32 %v329, %v323
        %v331 = vadd.f32 %v330, %v324
        %v332 = vadd.f32 %v331, %v325
        %v333 = vadd.f32 %v332, %v326
        %v334 = vadd.f32 %v333, %v327
        %v335 = vadd.f32 %v334, %v328
        %v336 = vrot.slane %v335, 4
        %v337 = vadd.f32 %v335, %v336
        %v338 = vrot.slane %v337, 2
        %v339 = vadd.f32 %v337, %v338
        %v340 = vrot.slane %v339, 1
        %v341 = vadd.f32 %v339, %v340
        %v342 = vmul.f32 %v321, %v321
        %v343 = vmul.f32 %v322, %v322
        %v344 = vmul.f32 %v323, %v323
        %v345 = vmul.f32 %v324, %v324
        %v346 = vmul.f32 %v325, %v325
        %v347 = vmul.f32 %v326, %v326
        %v348 = vmul.f32 %v327, %v327
        %v349 = vmul.f32 %v328, %v328
        %v350 = vadd.f32 %v342, %v343
        %v351 = vadd.f32 %v350, %v344
        %v352 = vadd.f32 %v351, %v345
        %v353 = vadd.f32 %v352, %v346
        %v354 = vadd.f32 %v353, %v347
        %v355 = vadd.f32 %v354, %v348
        %v356 = vadd.f32 %v355, %v349
        %v357 = vrot.slane %v356, 4
        %v358 = vadd.f32 %v356, %v357
        %v359 = vrot.slane %v358, 2
        %v360 = vadd.f32 %v358, %v359
        %v361 = vrot.slane %v360, 1
        %v362 = vadd.f32 %v360, %v361
        %vm363 = vcmask 1040384
        %v364 = vsel %vm363, %v341, %v362
        %365 = vst [vmem:[%s218] sm:$0x3] %v364
        %s366 = sand.u32 %s80, 1
        %s367 = scalar_lea.sflag [#allocation4], %s366
        %s368 = sand.u32 %s80, 1
        %s369 = smul.addr %s368, 64
        %s370 = scalar_lea.vmem [#allocation7], %s369
        %s371 = sand.u32 %s106, 1
        %s372 = scalar_lea.sflag [#allocation9], %s371
        %s373 = sand.u32 %s106, 1
        %s374 = smul.addr %s373, 2
        %s375 = scalar_lea.vmem [#allocation8], %s374
        // Predicated region
        $region37: #{tpu_custom_call.1} parent=27 // pred_check
          %p376 = pneg %p90
        $region38: #{tpu_custom_call.1} parent=27 // pred_check_branch
          %378 = sbr.rel (%p376) target = $region40
        $region39: #{tpu_custom_call.1} parent=27 // pred_region
          %s379 = smul.u32 8, %s25
          %381 = vsyncadd %s367, 0
          %s382 = smul.addr %s379, 8
          %s383 = scalar_lea.hbm %s2, %s382
          %s384 = sshll.u32 %s370, 4
          %s385 = int_to_ptr.vmem [resolvable:$true] %s384
          %s386 = sshll.u32 %s383, 4
          %s387 = int_to_ptr.hbm [resolvable:$true] %s386
          %392 = dma.vmem_to_hbm [thread:$0]  %s385, 1024, %s387, %s367, 128, 128, 8
        $region40: #{tpu_custom_call.1} parent=27 // pred_fallthru
          _
        // Predicated region
        $region41: #{tpu_custom_call.1} parent=27 // pred_check
          %p393 = pneg %p116
        $region42: #{tpu_custom_call.1} parent=27 // pred_check_branch
          %395 = sbr.rel (%p393) target = $region44
        $region43: #{tpu_custom_call.1} parent=27 // pred_region
          %397 = vsyncadd %s372, 0
          %s398 = smul.addr %s25, 2
          %s399 = scalar_lea.hbm %s3, %s398
          %s401 = sshll.u32 %s375, 4
          %s402 = int_to_ptr.vmem [resolvable:$true] %s401
          %s403 = sshll.u32 %s399, 4
          %s404 = int_to_ptr.hbm [resolvable:$true] %s403
          %406 = dma.vmem_to_hbm [thread:$0]  %s402, 32, %s404, %s372
        $region44: #{tpu_custom_call.1} parent=27 // pred_fallthru
          _
      $region28: #{tpu_custom_call.1} parent=5 // pred_fallthru
        _
      %p407 = scmp.le.s32.totalorder 2, %s20
      // Predicated region
      $region45: #{tpu_custom_call.1} parent=5 // pred_check
        %p408 = pneg %p407
      $region46: #{tpu_custom_call.1} parent=5 // pred_check_branch
        %410 = sbr.rel (%p408) target = $region48
      $region47: #{tpu_custom_call.1} parent=5 // pred_region
        %s411 = ssub.s32 %s20, 2
        // Predicated region
        $region49: #{tpu_custom_call.1} parent=47 // pred_check
          %p412 = pneg %p96
        $region50: #{tpu_custom_call.1} parent=47 // pred_check_branch
          %414 = sbr.rel (%p412) target = $region52
        $region51: #{tpu_custom_call.1} parent=47 // pred_region
          %s415 = sand.u32 %s81, 1
          %s416 = scalar_lea.sflag [#allocation4], %s415
          %s417 = sand.u32 %s81, 1
          %s418 = smul.addr %s417, 64
          %s419 = scalar_lea.vmem [#allocation7], %s418
          %421 = dma.done %s416, 1024
        $region52: #{tpu_custom_call.1} parent=47 // pred_fallthru
          _
        // Predicated region
        $region53: #{tpu_custom_call.1} parent=47 // pred_check
          %p422 = pneg %p122
        $region54: #{tpu_custom_call.1} parent=47 // pred_check_branch
          %424 = sbr.rel (%p422) target = $region56
        $region55: #{tpu_custom_call.1} parent=47 // pred_region
          %s425 = sand.u32 %s107, 1
          %s426 = scalar_lea.sflag [#allocation9], %s425
          %s427 = sand.u32 %s107, 1
          %s428 = smul.addr %s427, 2
          %s429 = scalar_lea.vmem [#allocation8], %s428
          %431 = dma.done %s426, 32
        $region56: #{tpu_custom_call.1} parent=47 // pred_fallthru
          _
      $region48: #{tpu_custom_call.1} parent=5 // pred_fallthru
        _
    $region6: #{tpu_custom_call.1} parent=1 // loop_footer
      %s24 = sadd.s32 1, %s20
    $region7: #{tpu_custom_call.1} parent=1 // loop_footer_branch
      %19 = sbr.rel target = $region3
    $region8: #{tpu_custom_call.1} parent=1 // loop_exit
      _
    %432 = vsyncpa [#allocation3], 1
    %s433 = scalar_lea.sflag [#allocation3], 1
    %434 = vsyncpa %s433, 1
    %435 = vsyncpa [#allocation6], 1
    %436 = vsyncpa [#allocation4], 1
    %s437 = scalar_lea.sflag [#allocation4], 1
    %438 = vsyncpa %s437, 1
    %439 = vsyncpa [#allocation9], 1
    %s440 = scalar_lea.sflag [#allocation9], 1
    %441 = vsyncpa %s440, 1

</llo_original>
